<compile_context>
chip_gen: v5e
topology: v5e:2x2
jax: 0.10.0
libtpu: 0.0.40
codegen_flags: <defaults>
</compile_context>

<pallas_src>
import functools

import jax
import jax.numpy as jnp
from jax import lax
from jax.experimental import pallas as pl
from jax.experimental.pallas import tpu as pltpu

# Safe, explicit scoped-VMEM budget on all generations (v7x physical is 64 MiB).
_VMEM_LIMIT = 32 * 1024 * 1024


def _pick_tile(dim, target, align):
    """Largest tile <= target that divides dim and is a multiple of align.

    Falls back to the full extent (always a legal block shape)."""
    t = min(target, dim)
    t -= t % align
    while t >= align:
        if dim % t == 0:
            return t
        t -= align
    return dim


# --------------------- tiled GEMM kernels (c_attn / c_proj) ---------------------

def _matmul_kernel(x_ref, w_ref, o_ref, acc_ref, *, compute_dtype):
    @pl.when(pl.program_id(2) == 0)
    def _init():
        acc_ref[...] = jnp.zeros_like(acc_ref[...])

    acc_ref[...] += jnp.dot(
        x_ref[...].astype(compute_dtype),
        w_ref[...].astype(compute_dtype),
        preferred_element_type=jnp.float32,
    )

    @pl.when(pl.program_id(2) == pl.num_programs(2) - 1)
    def _finalize():
        o_ref[...] = acc_ref[...].astype(o_ref.dtype)


def _matmul_bias_kernel(x_ref, w_ref, b_ref, o_ref, acc_ref, *, compute_dtype):
    @pl.when(pl.program_id(2) == 0)
    def _init():
        acc_ref[...] = jnp.zeros_like(acc_ref[...])

    acc_ref[...] += jnp.dot(
        x_ref[...].astype(compute_dtype),
        w_ref[...].astype(compute_dtype),
        preferred_element_type=jnp.float32,
    )

    @pl.when(pl.program_id(2) == pl.num_programs(2) - 1)
    def _finalize():
        o_ref[...] = (
            acc_ref[...] + b_ref[...].astype(jnp.float32)
        ).astype(o_ref.dtype)


def linear(x, w, b=None, *, tm=256, tn=256, tk=512, compute_dtype=jnp.bfloat16):
    """x: [M, K], w: [K, N] (pre-transposed), b: [N] or None."""
    M, K = x.shape
    _, N = w.shape
    tm = _pick_tile(M, tm, 8)
    tn = _pick_tile(N, tn, 128)
    tk = _pick_tile(K, tk, 128)
    grid = (M // tm, N // tn, K // tk)

    x_spec = pl.BlockSpec((tm, tk), lambda i, j, k: (i, k))
    w_spec = pl.BlockSpec((tk, tn), lambda i, j, k: (k, j))

    common = dict(
        out_shape=jax.ShapeDtypeStruct((M, N), x.dtype),
        grid=grid,
        out_specs=pl.BlockSpec((tm, tn), lambda i, j, k: (i, j)),
        scratch_shapes=[pltpu.VMEM((tm, tn), jnp.float32)],
        compiler_params=pltpu.CompilerParams(
            dimension_semantics=("parallel", "parallel", "arbitrary"),
            vmem_limit_bytes=_VMEM_LIMIT,
        ),
    )

    if b is not None:
        return pl.pallas_call(
            functools.partial(_matmul_bias_kernel, compute_dtype=compute_dtype),
            in_specs=[x_spec, w_spec, pl.BlockSpec((1, tn), lambda i, j, k: (0, j))],
            **common,
        )(x, w, b.reshape(1, N))
    return pl.pallas_call(
        functools.partial(_matmul_kernel, compute_dtype=compute_dtype),
        in_specs=[x_spec, w_spec],
        **common,
    )(x, w)


# -------------------- fused RoPE + flash causal attention --------------------

def _flash_rope_attn_kernel(
    q_ref, k_ref, v_ref, cos_q_ref, sin_q_ref, cos_k_ref, sin_k_ref,
    o_ref, q_rot_sc, m_sc, l_sc, acc_sc,
    *, scaling, tq, tkv, compute_dtype,
):
    qi = pl.program_id(1)
    ki = pl.program_id(2)
    half = q_ref.shape[-1] // 2

    def rotate_half(x):
        # NeoX-style rotation: [-x2, x1]  (portable slice+concat; no pltpu.roll)
        return jnp.concatenate([-x[:, half:], x[:, :half]], axis=-1)

    @pl.when(ki == 0)
    def _init():
        m_sc[...] = jnp.full_like(m_sc[...], -jnp.inf)
        l_sc[...] = jnp.zeros_like(l_sc[...])
        acc_sc[...] = jnp.zeros_like(acc_sc[...])
        # Rotate + pre-scale the q tile once per (head, q_tile); reuse across
        # all kv tiles (q block index_map is independent of ki, so the block
        # stays resident in VMEM).
        q = q_ref[...].astype(jnp.float32)
        q_r = q * cos_q_ref[...] + rotate_half(q) * sin_q_ref[...]
        q_rot_sc[...] = (q_r * scaling).astype(compute_dtype)

    # Skip kv tiles that lie entirely above the causal diagonal.
    @pl.when(ki * tkv < (qi + 1) * tq)
    def _compute():
        k = k_ref[...].astype(jnp.float32)                       # [tkv, hd]
        k_r = k * cos_k_ref[...] + rotate_half(k) * sin_k_ref[...]

        # scores (bf16 MXU operands, f32 accumulate / mask / softmax)
        s = lax.dot_general(
            q_rot_sc[...], k_r.astype(compute_dtype),
            (((1,), (1,)), ((), ())),
            preferred_element_type=jnp.float32,
        )                                                        # [tq, tkv]

        row = qi * tq + lax.broadcasted_iota(jnp.int32, s.shape, 0)
        col = ki * tkv + lax.broadcasted_iota(jnp.int32, s.shape, 1)
        s = jnp.where(col <= row, s, -1e30)                      # causal mask

        m_prev = m_sc[...]
        m_new = jnp.maximum(m_prev, jnp.max(s, axis=-1, keepdims=True))
        alpha = jnp.exp(m_prev - m_new)
        p = jnp.exp(s - m_new)
        l_sc[...] = alpha * l_sc[...] + jnp.sum(p, axis=-1, keepdims=True)
        acc_sc[...] = alpha * acc_sc[...] + jnp.dot(
            p.astype(compute_dtype), v_ref[...].astype(compute_dtype),
            preferred_element_type=jnp.float32,
        )
        m_sc[...] = m_new

    @pl.when(ki == pl.num_programs(2) - 1)
    def _finalize():
        inv_l = 1.0 / l_sc[...]                                  # [tq, 1]
        o_ref[...] = (acc_sc[...] * inv_l).astype(o_ref.dtype)


def rope_flash_attention(qkv, cos_full, sin_full, num_heads, head_dim, scaling,
                         out_dtype, *, tq=256, tkv=256,
                         compute_dtype=jnp.bfloat16):
    """qkv: [S, 3*nh*hd]; cos_full/sin_full: [S, hd]. Returns [S, nh*hd]."""
    S = qkv.shape[0]
    # q/k/v head columns are sliced out of qkv directly by the BlockSpecs, so
    # the per-head block last-dim must be lane-aligned.
    assert head_dim % 128 == 0, "head_dim must be a multiple of 128"
    # TODO(synk): add a packed-layout fallback for head_dim < 128.

    tq = _pick_tile(S, tq, 8)
    tkv = _pick_tile(S, tkv, 8)
    grid = (num_heads, S // tq, S // tkv)
    nh = num_heads

    kernel = functools.partial(
        _flash_rope_attn_kernel,
        scaling=scaling, tq=tq, tkv=tkv, compute_dtype=compute_dtype,
    )

    return pl.pallas_call(
        kernel,
        out_shape=jax.ShapeDtypeStruct((S, num_heads * head_dim), out_dtype),
        grid=grid,
        in_specs=[
            # q / k / v head columns sliced straight from the fused qkv tensor
            pl.BlockSpec((tq, head_dim), lambda h, qi, ki: (qi, h)),
            pl.BlockSpec((tkv, head_dim), lambda h, qi, ki: (ki, nh + h)),
            pl.BlockSpec((tkv, head_dim), lambda h, qi, ki: (ki, 2 * nh + h)),
            # RoPE tables for the q rows and the kv rows
            pl.BlockSpec((tq, head_dim), lambda h, qi, ki: (qi, 0)),
            pl.BlockSpec((tq, head_dim), lambda h, qi, ki: (qi, 0)),
            pl.BlockSpec((tkv, head_dim), lambda h, qi, ki: (ki, 0)),
            pl.BlockSpec((tkv, head_dim), lambda h, qi, ki: (ki, 0)),
        ],
        # Write directly into the [S, nh*hd] slab that c_proj consumes.
        out_specs=pl.BlockSpec((tq, head_dim), lambda h, qi, ki: (qi, h)),
        scratch_shapes=[
            pltpu.VMEM((tq, head_dim), compute_dtype),  # cached rotated/scaled q
            pltpu.VMEM((tq, 1), jnp.float32),           # running max m
            pltpu.VMEM((tq, 1), jnp.float32),           # running sum l
            pltpu.VMEM((tq, head_dim), jnp.float32),    # output accumulator
        ],
        compiler_params=pltpu.CompilerParams(
            dimension_semantics=("parallel", "parallel", "arbitrary"),
            vmem_limit_bytes=_VMEM_LIMIT,
        ),
    )(qkv, qkv, qkv, cos_full, sin_full, cos_full, sin_full)


# ------------------------------ module wrapper ------------------------------

def init_qwen_attention_params(key, hidden_size, num_heads):
    head_dim = hidden_size // num_heads
    k1, k2, k3 = jax.random.split(key, 3)
    std = hidden_size ** -0.5
    return {
        # weights stored pre-transposed: [Din, Dout]
        "c_attn_w": jax.random.normal(
            k1, (hidden_size, 3 * num_heads * head_dim), jnp.float32) * std,
        "c_attn_b": jax.random.normal(
            k2, (3 * num_heads * head_dim,), jnp.float32) * 0.02,
        "c_proj_w": jax.random.normal(
            k3, (num_heads * head_dim, hidden_size), jnp.float32) * std,
        "num_heads": num_heads,
        "head_dim": head_dim,
    }


def qwen_attention_forward(params, positions, hidden_states, rope_theta=10000.0):
    S, H = hidden_states.shape
    nh = params["num_heads"]
    hd = params["head_dim"]

    # c_attn (fused qkv projection) — the only intermediate HBM tensor.
    qkv = linear(hidden_states, params["c_attn_w"], params["c_attn_b"])  # [S, 3H]

    # RoPE tables (rotary_dim == head_dim), pre-expanded to full head width so
    # the in-kernel rotation is rotate_half + two full-vreg multiplies.
    inv_freq = 1.0 / (
        rope_theta ** (jnp.arange(0, hd, 2, dtype=jnp.float32) / hd)
    )
    freqs = positions.astype(jnp.float32)[:, None] * inv_freq[None, :]  # [S, hd//2]
    cos = jnp.cos(freqs)
    sin = jnp.sin(freqs)
    cos_full = jnp.concatenate([cos, cos], axis=-1)   # [S, hd]
    sin_full = jnp.concatenate([sin, sin], axis=-1)   # [S, hd]

    scaling = float(hd) ** -0.5
    attn = rope_flash_attention(
        qkv, cos_full, sin_full, nh, hd, scaling, hidden_states.dtype
    )                                                 # [S, nh*hd]

    # c_proj (no bias) consumes the head-concat layout directly.
    return linear(attn, params["c_proj_w"])


# ----------------------------------- main -----------------------------------

if __name__ == "__main__":
    # Small but lane-aligned shapes: head_dim = 128 (matches real QWen heads).
    hidden_size = 256
    num_heads = 2
    seq_len = 128

    key = jax.random.PRNGKey(0)
    k_param, k_x = jax.random.split(key)

    params = init_qwen_attention_params(k_param, hidden_size, num_heads)
    hidden_states = jax.random.normal(k_x, (seq_len, hidden_size), jnp.float32)
    positions = jnp.arange(seq_len, dtype=jnp.int32)

    out = qwen_attention_forward(params, positions, hidden_states)
    jax.block_until_ready(out)
    assert out.shape == (seq_len, hidden_size)
    assert bool(jnp.all(jnp.isfinite(out)))
    print("KERNEL_OK")
</pallas_src>

<mosaic_0001>
module attributes {stable_mosaic.version = 11 : i64} {
  func.func @_matmul_bias_kernel(%arg0: i32, %arg1: i32, %arg2: i32, %arg3: memref<128x256xf32, #tpu.memory_space<vmem>>, %arg4: memref<256x256xf32, #tpu.memory_space<vmem>>, %arg5: memref<1x256xf32, #tpu.memory_space<vmem>>, %arg6: memref<128x256xf32, #tpu.memory_space<vmem>>, %arg7: memref<128x256xf32, #tpu.memory_space<vmem>>) attributes {dimension_semantics = [#tpu.dimension_semantics<parallel>, #tpu.dimension_semantics<parallel>, #tpu.dimension_semantics<arbitrary>], iteration_bounds = array<i64: 1, 3, 1>, scalar_prefetch = 0 : i64, scratch_operands = 1 : i64, tpu.core_type = #tpu.core_type<tc>, window_params = [{transform_indices = @transform_0, window_bounds = array<i64: 128, 256>}, {transform_indices = @transform_1, window_bounds = array<i64: 256, 256>}, {transform_indices = @transform_2, window_bounds = array<i64: 1, 256>}, {transform_indices = @transform_3, window_bounds = array<i64: 128, 256>}]} {
    %c0_i32 = arith.constant 0 : i32
    %0 = arith.cmpi eq, %arg2, %c0_i32 : i32
    %1 = arith.extui %0 : i1 to i32
    %c0_i32_0 = arith.constant 0 : i32
    %2 = arith.cmpi ne, %1, %c0_i32_0 : i32
    scf.if %2 {
      %cst_10 = arith.constant 0.000000e+00 : f32
      %14 = vector.broadcast %cst_10 : f32 to vector<128x256xf32>
      %c0_11 = arith.constant 0 : index
      %c0_12 = arith.constant 0 : index
      %15 = vector.load %arg7[%c0_11, %c0_12] : memref<128x256xf32, #tpu.memory_space<vmem>>, vector<128x256xf32>
      tpu.vector_store %arg7[%c0_11, %c0_12], %14 {strides = array<i32>} : memref<128x256xf32, #tpu.memory_space<vmem>>, vector<128x256xf32>,
    } else {
    }
    %c0 = arith.constant 0 : index
    %c0_1 = arith.constant 0 : index
    %3 = vector.load %arg7[%c0, %c0_1] : memref<128x256xf32, #tpu.memory_space<vmem>>, vector<128x256xf32>
    %c0_2 = arith.constant 0 : index
    %c0_3 = arith.constant 0 : index
    %4 = vector.load %arg3[%c0_2, %c0_3] : memref<128x256xf32, #tpu.memory_space<vmem>>, vector<128x256xf32>
    %5 = arith.truncf %4 : vector<128x256xf32> to vector<128x256xbf16>
    %c0_4 = arith.constant 0 : index
    %c0_5 = arith.constant 0 : index
    %6 = vector.load %arg4[%c0_4, %c0_5] : memref<256x256xf32, #tpu.memory_space<vmem>>, vector<256x256xf32>
    %7 = arith.truncf %6 : vector<256x256xf32> to vector<256x256xbf16>
    %cst = arith.constant dense<0.000000e+00> : vector<128x256xf32>
    %8 = tpu.matmul %5, %7, %cst {dimension_numbers = #tpu.dot_dimension_numbers<[1], [0], [0], [1], [0, 0, 1, 1], [], []>} : vector<128x256xbf16>, vector<256x256xbf16>, vector<128x256xf32> -> vector<128x256xf32>
    %9 = arith.addf %3, %8 : vector<128x256xf32>
    %c0_6 = arith.constant 0 : index
    %c0_7 = arith.constant 0 : index
    %10 = vector.load %arg7[%c0_6, %c0_7] : memref<128x256xf32, #tpu.memory_space<vmem>>, vector<128x256xf32>
    tpu.vector_store %arg7[%c0_6, %c0_7], %9 {strides = array<i32>} : memref<128x256xf32, #tpu.memory_space<vmem>>, vector<128x256xf32>,
    %c0_i32_8 = arith.constant 0 : i32
    %11 = arith.cmpi eq, %arg2, %c0_i32_8 : i32
    %12 = arith.extui %11 : i1 to i32
    %c0_i32_9 = arith.constant 0 : i32
    %13 = arith.cmpi ne, %12, %c0_i32_9 : i32
    scf.if %13 {
      %c0_10 = arith.constant 0 : index
      %c0_11 = arith.constant 0 : index
      %14 = vector.load %arg7[%c0_10, %c0_11] : memref<128x256xf32, #tpu.memory_space<vmem>>, vector<128x256xf32>
      %c0_12 = arith.constant 0 : index
      %c0_13 = arith.constant 0 : index
      %15 = vector.load %arg5[%c0_12, %c0_13] : memref<1x256xf32, #tpu.memory_space<vmem>>, vector<1x256xf32>
      %16 = vector.broadcast %15 : vector<1x256xf32> to vector<128x256xf32>
      %17 = arith.addf %14, %16 : vector<128x256xf32>
      %c0_14 = arith.constant 0 : index
      %c0_15 = arith.constant 0 : index
      %18 = vector.load %arg6[%c0_14, %c0_15] : memref<128x256xf32, #tpu.memory_space<vmem>>, vector<128x256xf32>
      tpu.vector_store %arg6[%c0_14, %c0_15], %17 {strides = array<i32>} : memref<128x256xf32, #tpu.memory_space<vmem>>, vector<128x256xf32>,
    } else {
    }
    return
  }
  func.func @transform_0(%arg0: i32, %arg1: i32, %arg2: i32) -> (i32, i32) {
    %c0_i32 = arith.constant 0 : i32
    return %arg0, %arg2 : i32, i32
  }
  func.func @transform_1(%arg0: i32, %arg1: i32, %arg2: i32) -> (i32, i32) {
    %c0_i32 = arith.constant 0 : i32
    return %arg2, %arg1 : i32, i32
  }
  func.func @transform_2(%arg0: i32, %arg1: i32, %arg2: i32) -> (i32, i32) {
    %c0_i32 = arith.constant 0 : i32
    %c0_i32_0 = arith.constant 0 : i32
    return %c0_i32, %arg1 : i32, i32
  }
  func.func @transform_3(%arg0: i32, %arg1: i32, %arg2: i32) -> (i32, i32) {
    %c0_i32 = arith.constant 0 : i32
    return %arg0, %arg1 : i32, i32
  }
}

</mosaic_0001>

<llo_original>
// kernel: tpu_custom_call.1
$region0: #{tpu_custom_call.1}
  #allocation0 [shape = 'u32[]', space=smem, size = 0x4, offset = 0x4, fixed_abs, tag = 'smem constant byte address 0x4 - core index']
  #allocation1 [shape = 'u32[72,128]{1,0:T(1,128)}', space=vmem, size = 0x9000, scoped, tag = 'internal scratch']
  #allocation2 [shape = 'f32[128,256]{1,0:T(8,128)}', space=vmem, size = 0x20000, scoped, tag = 'scratch operand']
  %s0 = inlined_call_operand.hbm [shape: f32[128,256], index: 0, kind: input, shape index: {}]
  %s1 = inlined_call_operand.hbm [shape: f32[256,768], index: 1, kind: input, shape index: {}]
  %s2 = inlined_call_operand.hbm [shape: f32[1,768], index: 2, kind: input, shape index: {}]
  %s3 = inlined_call_operand.hbm [shape: f32[128,768], index: 3, kind: output, shape index: {}]
  %s4 = sld [smem:[#allocation0]]
  $region65: #{tpu_custom_call.1} parent=0
    _
  %s6 = ssub.s32 1, %s4
  %s7 = scalar_select 0, %s6, %s4
  $region1: #{tpu_custom_call.1} parent=0
    #allocation3 [shape = 'u8[131072]{0}', space=vmem, size = 0x20000, scoped, tag = 'input window, operand 0, single buffered']
    #allocation4 [shape = 's32[2]{0}', space=sflag, size = 0x8, scoped, tag = 'scoped memory for tpu_custom_call.1']
    #allocation5 [shape = 's32[2]{0}', space=sflag, size = 0x8, scoped, tag = 'scoped memory for tpu_custom_call.1']
    #allocation6 [shape = 'u8[524288]{0}', space=vmem, size = 0x80000, scoped, tag = 'input window, operand 1']
    #allocation7 [shape = 's32[2]{0}', space=sflag, size = 0x8, scoped, tag = 'scoped memory for tpu_custom_call.1']
    #allocation8 [shape = 'u8[2048]{0}', space=vmem, size = 0x800, scoped, tag = 'input window, operand 2']
    #allocation9 [shape = 'u8[262144]{0}', space=vmem, size = 0x40000, scoped, tag = 'output window, operand 0']
    %8 = vsyncpa [#allocation4], 0
    %9 = vsyncpa [#allocation7], 0
    %s10 = scalar_lea.sflag [#allocation7], 1
    %11 = vsyncpa %s10, 0
    %12 = vsyncpa [#allocation5], 0
    %s13 = scalar_lea.sflag [#allocation5], 1
    %14 = vsyncpa %s13, 0
    loop: start=0, step=1, limit=5
    $region2: #{tpu_custom_call.1} parent=1 // loop_pre_header
      _
    $region3: #{tpu_custom_call.1} parent=1 // loop_header
      %s16 = sphi 0, %s20
      %p17 = scmp.ge.s32.totalorder %s16, 5
      %s23 = sphi 0, %s42
      %s24 = sphi 0, %s38
      %s25 = sphi 0, %s34
      %s26 = sphi 0, %s23
      %s27 = sphi 0, %s24
      %s28 = sphi 0, %s25
      %s29 = sphi 0, %s26
      %s30 = sphi 0, %s27
      %s31 = sphi 0, %s28
      %s47 = sphi 0, %s49
      %s50 = sphi 0, %s47
      %s51 = sphi 0, %s50
      %s67 = sphi 0, %s51
      %s75 = sphi 0, %s77
      %s78 = sphi 0, %s75
      %s79 = sphi 0, %s78
      %s95 = sphi 0, %s79
      %s101 = sphi 0, %s103
      %s104 = sphi 0, %s101
      %s105 = sphi 0, %s104
      %s121 = sphi 0, %s105
      %s129 = sphi 0, %s131
      %s132 = sphi 0, %s129
      %s133 = sphi 0, %s132
      %s149 = sphi 0, %s133
    $region4: #{tpu_custom_call.1} parent=1 // loop_header_branch
      %19 = sbr.rel (%p17) target = $region8
    $region5: #{tpu_custom_call.1} parent=1 // loop_body
      %s21 = ssub.s32 %s16, 1
      %s22 = ssub.s32 %s16, 2
      %s32 = sadd.s32 1, %s25
      %p33 = scmp.ge.s32.totalorder %s32, 1
      %s34 = scalar_select %p33, 0, %s32
      %s35 = sadd.s32 1, %s24
      %s36 = scalar_select %p33, %s35, %s24
      %p37 = scmp.ge.s32.totalorder %s36, 3
      %s38 = scalar_select %p37, 0, %s36
      %s39 = sadd.s32 1, %s23
      %s40 = scalar_select %p37, %s39, %s23
      %p41 = scmp.ge.s32.totalorder %s40, 1
      %s42 = scalar_select %p41, 0, %s40
      %s43 = ssub.s32 %s23, %s42
      %s44 = ssub.s32 %s25, %s34
      %s45 = sor.u32 %s43, %s44
      %p46 = scmp.eq.s32.totalorder %s45, 0
      %s48 = sadd.s32 %s47, 1
      %s49 = scalar_select %p46, %s47, %s48
      %p52 = pneg %p46
      %p53 = scmp.eq.s32.totalorder %s16, 2
      %p54 = por %p52, %p53
      %p55 = scmp.ne.s32.totalorder %s47, %s50
      %p56 = scmp.eq.s32.totalorder %s16, 0
      %p57 = por %p55, %p56
      %p58 = scmp.ne.s32.totalorder %s47, %s50
      %p59 = scmp.eq.s32.totalorder %s21, 2
      %p60 = por %p58, %p59
      %p61 = scmp.ne.s32.totalorder %s50, %s51
      %p62 = scmp.eq.s32.totalorder %s21, 0
      %p63 = por %p61, %p62
      %p64 = scmp.ne.s32.totalorder %s50, %s51
      %p65 = scmp.eq.s32.totalorder %s22, 2
      %p66 = por %p64, %p65
      %p68 = scmp.ne.s32.totalorder %s51, %s67
      %p69 = scmp.eq.s32.totalorder %s22, 0
      %p70 = por %p68, %p69
      %s71 = ssub.s32 %s25, %s34
      %s72 = ssub.s32 %s24, %s38
      %s73 = sor.u32 %s71, %s72
      %p74 = scmp.eq.s32.totalorder %s73, 0
      %s76 = sadd.s32 %s75, 1
      %s77 = scalar_select %p74, %s75, %s76
      %p80 = pneg %p74
      %p81 = scmp.eq.s32.totalorder %s16, 2
      %p82 = por %p80, %p81
      %p83 = scmp.ne.s32.totalorder %s75, %s78
      %p84 = scmp.eq.s32.totalorder %s16, 0
      %p85 = por %p83, %p84
      %p86 = scmp.ne.s32.totalorder %s75, %s78
      %p87 = scmp.eq.s32.totalorder %s21, 2
      %p88 = por %p86, %p87
      %p89 = scmp.ne.s32.totalorder %s78, %s79
      %p90 = scmp.eq.s32.totalorder %s21, 0
      %p91 = por %p89, %p90
      %p92 = scmp.ne.s32.totalorder %s78, %s79
      %p93 = scmp.eq.s32.totalorder %s22, 2
      %p94 = por %p92, %p93
      %p96 = scmp.ne.s32.totalorder %s79, %s95
      %p97 = scmp.eq.s32.totalorder %s22, 0
      %p98 = por %p96, %p97
      %s99 = ssub.s32 %s24, %s38
      %p100 = scmp.eq.s32.totalorder %s99, 0
      %s102 = sadd.s32 %s101, 1
      %s103 = scalar_select %p100, %s101, %s102
      %p106 = pneg %p100
      %p107 = scmp.eq.s32.totalorder %s16, 2
      %p108 = por %p106, %p107
      %p109 = scmp.ne.s32.totalorder %s101, %s104
      %p110 = scmp.eq.s32.totalorder %s16, 0
      %p111 = por %p109, %p110
      %p112 = scmp.ne.s32.totalorder %s101, %s104
      %p113 = scmp.eq.s32.totalorder %s21, 2
      %p114 = por %p112, %p113
      %p115 = scmp.ne.s32.totalorder %s104, %s105
      %p116 = scmp.eq.s32.totalorder %s21, 0
      %p117 = por %p115, %p116
      %p118 = scmp.ne.s32.totalorder %s104, %s105
      %p119 = scmp.eq.s32.totalorder %s22, 2
      %p120 = por %p118, %p119
      %p122 = scmp.ne.s32.totalorder %s105, %s121
      %p123 = scmp.eq.s32.totalorder %s22, 0
      %p124 = por %p122, %p123
      %s125 = ssub.s32 %s23, %s42
      %s126 = ssub.s32 %s24, %s38
      %s127 = sor.u32 %s125, %s126
      %p128 = scmp.eq.s32.totalorder %s127, 0
      %s130 = sadd.s32 %s129, 1
      %s131 = scalar_select %p128, %s129, %s130
      %p134 = pneg %p128
      %p135 = scmp.eq.s32.totalorder %s16, 2
      %p136 = por %p134, %p135
      %p137 = scmp.ne.s32.totalorder %s129, %s132
      %p138 = scmp.eq.s32.totalorder %s16, 0
      %p139 = por %p137, %p138
      %p140 = scmp.ne.s32.totalorder %s129, %s132
      %p141 = scmp.eq.s32.totalorder %s21, 2
      %p142 = por %p140, %p141
      %p143 = scmp.ne.s32.totalorder %s132, %s133
      %p144 = scmp.eq.s32.totalorder %s21, 0
      %p145 = por %p143, %p144
      %p146 = scmp.ne.s32.totalorder %s132, %s133
      %p147 = scmp.eq.s32.totalorder %s22, 2
      %p148 = por %p146, %p147
      %p150 = scmp.ne.s32.totalorder %s133, %s149
      %p151 = scmp.eq.s32.totalorder %s22, 0
      %p152 = por %p150, %p151
      %p153 = scmp.le.s32.totalorder 1, %s16
      %p154 = scmp.lt.s32.totalorder %s16, 4
      %p155 = pnand %p153, %p154
      %p156 = pneg %p155
      // Predicated region
      $region9: #{tpu_custom_call.1} parent=5 // pred_check
        _
      $region10: #{tpu_custom_call.1} parent=5 // pred_check_branch
        %158 = sbr.rel (%p155) target = $region12
      $region11: #{tpu_custom_call.1} parent=5 // pred_region
        %s159 = ssub.s32 %s16, 1
        // Predicated region
        $region13: #{tpu_custom_call.1} parent=11 // pred_check
          %p160 = pneg %p63
        $region14: #{tpu_custom_call.1} parent=11 // pred_check_branch
          %162 = sbr.rel (%p160) target = $region16
        $region15: #{tpu_custom_call.1} parent=11 // pred_region
          %s163 = smul.u32 16, %s26
          %s164 = smul.u32 2, %s28
          %166 = vsyncadd [#allocation4], 0
          %s167 = smul.addr %s163, 2
          %s168 = sadd.s32 %s164, %s167
          %s169 = smul.addr %s168, 8
          %s170 = scalar_lea.hbm %s0, %s169
          %s171 = sshll.u32 %s170, 4
          %s172 = int_to_ptr.hbm [resolvable:$true] %s171
          %s173 = sshll.u32 [#allocation3], 4
          %s174 = int_to_ptr.vmem [resolvable:$true] %s173
          %179 = dma.hbm_to_vmem [thread:$0]  %s172, 4096, %s174, [#allocation4], 256, 256, 16
        $region16: #{tpu_custom_call.1} parent=11 // pred_fallthru
          _
      $region12: #{tpu_custom_call.1} parent=5 // pred_fallthru
        _
      %p180 = scmp.lt.s32.totalorder %s16, 3
      // Predicated region
      $region17: #{tpu_custom_call.1} parent=5 // pred_check
        %p181 = pneg %p180
      $region18: #{tpu_custom_call.1} parent=5 // pred_check_branch
        %183 = sbr.rel (%p181) target = $region20
      $region19: #{tpu_custom_call.1} parent=5 // pred_region
        // Predicated region
        $region21: #{tpu_custom_call.1} parent=19 // pred_check
          %p184 = pneg %p85
        $region22: #{tpu_custom_call.1} parent=19 // pred_check_branch
          %186 = sbr.rel (%p184) target = $region24
        $region23: #{tpu_custom_call.1} parent=19 // pred_region
          %s187 = sand.u32 %s16, 1
          %s188 = scalar_lea.sflag [#allocation7], %s187
          %s189 = sand.u32 %s75, 1
          %s190 = smul.addr %s189, 512
          %s191 = scalar_lea.vmem [#allocation6], %s190
          %s192 = smul.u32 32, %s25
          %s193 = smul.u32 2, %s24
          %195 = vsyncadd %s188, 0
          %s196 = smul.addr %s192, 6
          %s197 = sadd.s32 %s193, %s196
          %s198 = smul.addr %s197, 8
          %s199 = scalar_lea.hbm %s1, %s198
          %s200 = sshll.u32 %s199, 4
          %s201 = int_to_ptr.hbm [resolvable:$true] %s200
          %s202 = sshll.u32 %s191, 4
          %s203 = int_to_ptr.vmem [resolvable:$true] %s202
          %208 = dma.hbm_to_vmem [thread:$0]  %s201, 8192, %s203, %s188, 768, 256, 16
        $region24: #{tpu_custom_call.1} parent=19 // pred_fallthru
          _
        // Predicated region
        $region25: #{tpu_custom_call.1} parent=19 // pred_check
          %p209 = pneg %p111
        $region26: #{tpu_custom_call.1} parent=19 // pred_check_branch
          %211 = sbr.rel (%p209) target = $region28
        $region27: #{tpu_custom_call.1} parent=19 // pred_region
          %s212 = sand.u32 %s16, 1
          %s213 = scalar_lea.sflag [#allocation7], %s212
          %s214 = sand.u32 %s101, 1
          %s215 = smul.addr %s214, 2
          %s216 = scalar_lea.vmem [#allocation8], %s215
          %s217 = smul.u32 2, %s24
          %219 = vsyncadd %s213, 0
          %s220 = scalar_lea.hbm %s2, %s217
          %s222 = sshll.u32 %s220, 4
          %s223 = int_to_ptr.hbm [resolvable:$true] %s222
          %s224 = sshll.u32 %s216, 4
          %s225 = int_to_ptr.vmem [resolvable:$true] %s224
          %227 = dma.hbm_to_vmem [thread:$0]  %s223, 32, %s225, %s213
        $region28: #{tpu_custom_call.1} parent=19 // pred_fallthru
          _
      $region20: #{tpu_custom_call.1} parent=5 // pred_fallthru
        _
      %p228 = scmp.le.s32.totalorder 1, %s16
      %p229 = scmp.lt.s32.totalorder %s16, 4
      %p230 = pnand %p228, %p229
      %p231 = pneg %p230
      // Predicated region
      $region29: #{tpu_custom_call.1} parent=5 // pred_check
        _
      $region30: #{tpu_custom_call.1} parent=5 // pred_check_branch
        %233 = sbr.rel (%p230) target = $region32
      $region31: #{tpu_custom_call.1} parent=5 // pred_region
        %s234 = ssub.s32 %s16, 1
        // Predicated region
        $region33: #{tpu_custom_call.1} parent=31 // pred_check
          %p235 = pneg %p63
        $region34: #{tpu_custom_call.1} parent=31 // pred_check_branch
          %237 = sbr.rel (%p235) target = $region36
        $region35: #{tpu_custom_call.1} parent=31 // pred_region
          %239 = dma.done [#allocation4], 4096
        $region36: #{tpu_custom_call.1} parent=31 // pred_fallthru
          _
        %s240 = sand.u32 %s21, 1
        %s241 = scalar_lea.sflag [#allocation7], %s240
        %s242 = sand.u32 %s78, 1
        %s243 = smul.addr %s242, 512
        %s244 = scalar_lea.vmem [#allocation6], %s243
        // Predicated region
        $region37: #{tpu_custom_call.1} parent=31 // pred_check
          %p245 = pneg %p91
        $region38: #{tpu_custom_call.1} parent=31 // pred_check_branch
          %247 = sbr.rel (%p245) target = $region40
        $region39: #{tpu_custom_call.1} parent=31 // pred_region
          %249 = dma.done %s241, 8192
        $region40: #{tpu_custom_call.1} parent=31 // pred_fallthru
          _
        %s250 = sand.u32 %s21, 1
        %s251 = scalar_lea.sflag [#allocation7], %s250
        %s252 = sand.u32 %s104, 1
        %s253 = smul.addr %s252, 2
        %s254 = scalar_lea.vmem [#allocation8], %s253
        // Predicated region
        $region41: #{tpu_custom_call.1} parent=31 // pred_check
          %p255 = pneg %p117
        $region42: #{tpu_custom_call.1} parent=31 // pred_check_branch
          %257 = sbr.rel (%p255) target = $region44
        $region43: #{tpu_custom_call.1} parent=31 // pred_region
          %259 = dma.done %s251, 32
        $region44: #{tpu_custom_call.1} parent=31 // pred_fallthru
          _
        %p260 = pneg %p63
        %p261 = pneg %p60
        %s262 = sand.u32 %s21, 1
        %s263 = scalar_lea.sflag [#allocation7], %s262
        %s264 = sand.u32 %s78, 1
        %s265 = smul.addr %s264, 512
        %s266 = scalar_lea.vmem [#allocation6], %s265
        %p267 = pneg %p91
        %p268 = pneg %p88
        %s269 = sand.u32 %s21, 1
        %s270 = scalar_lea.sflag [#allocation7], %s269
        %s271 = sand.u32 %s104, 1
        %s272 = smul.addr %s271, 2
        %s273 = scalar_lea.vmem [#allocation8], %s272
        %p274 = pneg %p117
        %p275 = pneg %p114
        %p276 = pneg %p145
        %p277 = pneg %p142
        %s278 = sand.u32 %s132, 1
        %s279 = scalar_lea.sflag [#allocation5], %s278
        %s280 = sand.u32 %s132, 1
        %s281 = smul.addr %s280, 256
        %s282 = scalar_lea.vmem [#allocation9], %s281
        %s283 = smul.u32 16, %s26
        %s284 = smul.u32 2, %s28
        %s285 = smul.u32 32, %s28
        %s286 = smul.u32 2, %s27
        %s287 = smul.u32 2, %s27
        %s288 = smul.u32 16, %s26
        %s289 = smul.u32 2, %s27
        %p290 = scmp.eq.s32.totalorder %s28, 0
        // Predicated region
        $region45: #{tpu_custom_call.1} parent=31 // pred_check
          %p291 = pneg %p290
        $region46: #{tpu_custom_call.1} parent=31 // pred_check_branch
          %293 = sbr.rel (%p291) target = $region48
        $region47: #{tpu_custom_call.1} parent=31 // pred_region
          %294 = vst [vmem:[#allocation2] sm:$0xff] 0.0
          %295 = vst [vmem:[#allocation2 + $0x8] sm:$0xff] 0.0
          %296 = vst [vmem:[#allocation2 + $0x10] sm:$0xff] 0.0
          %297 = vst [vmem:[#allocation2 + $0x18] sm:$0xff] 0.0
          %298 = vst [vmem:[#allocation2 + $0x20] sm:$0xff] 0.0
          %299 = vst [vmem:[#allocation2 + $0x28] sm:$0xff] 0.0
          %300 = vst [vmem:[#allocation2 + $0x30] sm:$0xff] 0.0
          %301 = vst [vmem:[#allocation2 + $0x38] sm:$0xff] 0.0
          %302 = vst [vmem:[#allocation2 + $0x40] sm:$0xff] 0.0
          %303 = vst [vmem:[#allocation2 + $0x48] sm:$0xff] 0.0
          %304 = vst [vmem:[#allocation2 + $0x50] sm:$0xff] 0.0
          %305 = vst [vmem:[#allocation2 + $0x58] sm:$0xff] 0.0
          %306 = vst [vmem:[#allocation2 + $0x60] sm:$0xff] 0.0
          %307 = vst [vmem:[#allocation2 + $0x68] sm:$0xff] 0.0
          %308 = vst [vmem:[#allocation2 + $0x70] sm:$0xff] 0.0
          %309 = vst [vmem:[#allocation2 + $0x78] sm:$0xff] 0.0
          %310 = vst [vmem:[#allocation2 + $0x80] sm:$0xff] 0.0
          %311 = vst [vmem:[#allocation2 + $0x88] sm:$0xff] 0.0
          %312 = vst [vmem:[#allocation2 + $0x90] sm:$0xff] 0.0
          %313 = vst [vmem:[#allocation2 + $0x98] sm:$0xff] 0.0
          %314 = vst [vmem:[#allocation2 + $0xa0] sm:$0xff] 0.0
          %315 = vst [vmem:[#allocation2 + $0xa8] sm:$0xff] 0.0
          %316 = vst [vmem:[#allocation2 + $0xb0] sm:$0xff] 0.0
          %317 = vst [vmem:[#allocation2 + $0xb8] sm:$0xff] 0.0
          %318 = vst [vmem:[#allocation2 + $0xc0] sm:$0xff] 0.0
          %319 = vst [vmem:[#allocation2 + $0xc8] sm:$0xff] 0.0
          %320 = vst [vmem:[#allocation2 + $0xd0] sm:$0xff] 0.0
          %321 = vst [vmem:[#allocation2 + $0xd8] sm:$0xff] 0.0
          %322 = vst [vmem:[#allocation2 + $0xe0] sm:$0xff] 0.0
          %323 = vst [vmem:[#allocation2 + $0xe8] sm:$0xff] 0.0
          %324 = vst [vmem:[#allocation2 + $0xf0] sm:$0xff] 0.0
          %325 = vst [vmem:[#allocation2 + $0xf8] sm:$0xff] 0.0
        $region48: #{tpu_custom_call.1} parent=31 // pred_fallthru
          _
        %v326 = vld [vmem:[#allocation2] sm:$0xff]
        %v327 = vld [vmem:[#allocation2 + $0x8] sm:$0xff]
        %v328 = vld [vmem:[#allocation2 + $0x10] sm:$0xff]
        %v329 = vld [vmem:[#allocation2 + $0x18] sm:$0xff]
        %v330 = vld [vmem:[#allocation2 + $0x20] sm:$0xff]
        %v331 = vld [vmem:[#allocation2 + $0x28] sm:$0xff]
        %v332 = vld [vmem:[#allocation2 + $0x30] sm:$0xff]
        %v333 = vld [vmem:[#allocation2 + $0x38] sm:$0xff]
        %v334 = vld [vmem:[#allocation2 + $0x40] sm:$0xff]
        %v335 = vld [vmem:[#allocation2 + $0x48] sm:$0xff]
        %v336 = vld [vmem:[#allocation2 + $0x50] sm:$0xff]
        %v337 = vld [vmem:[#allocation2 + $0x58] sm:$0xff]
        %v338 = vld [vmem:[#allocation2 + $0x60] sm:$0xff]
        %v339 = vld [vmem:[#allocation2 + $0x68] sm:$0xff]
        %v340 = vld [vmem:[#allocation2 + $0x70] sm:$0xff]
        %v341 = vld [vmem:[#allocation2 + $0x78] sm:$0xff]
        %v342 = vld [vmem:[#allocation2 + $0x80] sm:$0xff]
        %v343 = vld [vmem:[#allocation2 + $0x88] sm:$0xff]
        %v344 = vld [vmem:[#allocation2 + $0x90] sm:$0xff]
        %v345 = vld [vmem:[#allocation2 + $0x98] sm:$0xff]
        %v346 = vld [vmem:[#allocation2 + $0xa0] sm:$0xff]
        %v347 = vld [vmem:[#allocation2 + $0xa8] sm:$0xff]
        %v348 = vld [vmem:[#allocation2 + $0xb0] sm:$0xff]
        %v349 = vld [vmem:[#allocation2 + $0xb8] sm:$0xff]
        %v350 = vld [vmem:[#allocation2 + $0xc0] sm:$0xff]
        %v351 = vld [vmem:[#allocation2 + $0xc8] sm:$0xff]
        %v352 = vld [vmem:[#allocation2 + $0xd0] sm:$0xff]
        %v353 = vld [vmem:[#allocation2 + $0xd8] sm:$0xff]
        %v354 = vld [vmem:[#allocation2 + $0xe0] sm:$0xff]
        %v355 = vld [vmem:[#allocation2 + $0xe8] sm:$0xff]
        %v356 = vld [vmem:[#allocation2 + $0xf0] sm:$0xff]
        %v357 = vld [vmem:[#allocation2 + $0xf8] sm:$0xff]
        %v358 = vld [vmem:[#allocation3] sm:$0xff]
        %v359 = vld [vmem:[#allocation3 + $0x8] sm:$0xff]
        %v360 = vld [vmem:[#allocation3 + $0x10] sm:$0xff]
        %v361 = vld [vmem:[#allocation3 + $0x18] sm:$0xff]
        %v362 = vld [vmem:[#allocation3 + $0x20] sm:$0xff]
        %v363 = vld [vmem:[#allocation3 + $0x28] sm:$0xff]
        %v364 = vld [vmem:[#allocation3 + $0x30] sm:$0xff]
        %v365 = vld [vmem:[#allocation3 + $0x38] sm:$0xff]
        %v366 = vld [vmem:[#allocation3 + $0x40] sm:$0xff]
        %v367 = vld [vmem:[#allocation3 + $0x48] sm:$0xff]
        %v368 = vld [vmem:[#allocation3 + $0x50] sm:$0xff]
        %v369 = vld [vmem:[#allocation3 + $0x58] sm:$0xff]
        %v370 = vld [vmem:[#allocation3 + $0x60] sm:$0xff]
        %v371 = vld [vmem:[#allocation3 + $0x68] sm:$0xff]
        %v372 = vld [vmem:[#allocation3 + $0x70] sm:$0xff]
        %v373 = vld [vmem:[#allocation3 + $0x78] sm:$0xff]
        %v374 = vld [vmem:[#allocation3 + $0x80] sm:$0xff]
        %v375 = vld [vmem:[#allocation3 + $0x88] sm:$0xff]
        %v376 = vld [vmem:[#allocation3 + $0x90] sm:$0xff]
        %v377 = vld [vmem:[#allocation3 + $0x98] sm:$0xff]
        %v378 = vld [vmem:[#allocation3 + $0xa0] sm:$0xff]
        %v379 = vld [vmem:[#allocation3 + $0xa8] sm:$0xff]
        %v380 = vld [vmem:[#allocation3 + $0xb0] sm:$0xff]
        %v381 = vld [vmem:[#allocation3 + $0xb8] sm:$0xff]
        %v382 = vld [vmem:[#allocation3 + $0xc0] sm:$0xff]
        %v383 = vld [vmem:[#allocation3 + $0xc8] sm:$0xff]
        %v384 = vld [vmem:[#allocation3 + $0xd0] sm:$0xff]
        %v385 = vld [vmem:[#allocation3 + $0xd8] sm:$0xff]
        %v386 = vld [vmem:[#allocation3 + $0xe0] sm:$0xff]
        %v387 = vld [vmem:[#allocation3 + $0xe8] sm:$0xff]
        %v388 = vld [vmem:[#allocation3 + $0xf0] sm:$0xff]
        %v389 = vld [vmem:[#allocation3 + $0xf8] sm:$0xff]
        %v390 = vpack.c.bf16 %v360, %v358
        %v391 = vpack.c.bf16 %v361, %v359
        %v392 = vpack.c.bf16 %v364, %v362
        %v393 = vpack.c.bf16 %v365, %v363
        %v394 = vpack.c.bf16 %v368, %v366
        %v395 = vpack.c.bf16 %v369, %v367
        %v396 = vpack.c.bf16 %v372, %v370
        %v397 = vpack.c.bf16 %v373, %v371
        %v398 = vpack.c.bf16 %v376, %v374
        %v399 = vpack.c.bf16 %v377, %v375
        %v400 = vpack.c.bf16 %v380, %v378
        %v401 = vpack.c.bf16 %v381, %v379
        %v402 = vpack.c.bf16 %v384, %v382
        %v403 = vpack.c.bf16 %v385, %v383
        %v404 = vpack.c.bf16 %v388, %v386
        %v405 = vpack.c.bf16 %v389, %v387
        %v406 = vld [vmem:[%s244] sm:$0xff]
        %v407 = vld [vmem:[%s244 + $0x8] sm:$0xff]
        %v408 = vld [vmem:[%s244 + $0x10] sm:$0xff]
        %v409 = vld [vmem:[%s244 + $0x18] sm:$0xff]
        %v410 = vld [vmem:[%s244 + $0x20] sm:$0xff]
        %v411 = vld [vmem:[%s244 + $0x28] sm:$0xff]
        %v412 = vld [vmem:[%s244 + $0x30] sm:$0xff]
        %v413 = vld [vmem:[%s244 + $0x38] sm:$0xff]
        %v414 = vld [vmem:[%s244 + $0x40] sm:$0xff]
        %v415 = vld [vmem:[%s244 + $0x48] sm:$0xff]
        %v416 = vld [vmem:[%s244 + $0x50] sm:$0xff]
        %v417 = vld [vmem:[%s244 + $0x58] sm:$0xff]
        %v418 = vld [vmem:[%s244 + $0x60] sm:$0xff]
        %v419 = vld [vmem:[%s244 + $0x68] sm:$0xff]
        %v420 = vld [vmem:[%s244 + $0x70] sm:$0xff]
        %v421 = vld [vmem:[%s244 + $0x78] sm:$0xff]
        %v422 = vld [vmem:[%s244 + $0x80] sm:$0xff]
        %v423 = vld [vmem:[%s244 + $0x88] sm:$0xff]
        %v424 = vld [vmem:[%s244 + $0x90] sm:$0xff]
        %v425 = vld [vmem:[%s244 + $0x98] sm:$0xff]
        %v426 = vld [vmem:[%s244 + $0xa0] sm:$0xff]
        %v427 = vld [vmem:[%s244 + $0xa8] sm:$0xff]
        %v428 = vld [vmem:[%s244 + $0xb0] sm:$0xff]
        %v429 = vld [vmem:[%s244 + $0xb8] sm:$0xff]
        %v430 = vld [vmem:[%s244 + $0xc0] sm:$0xff]
        %v431 = vld [vmem:[%s244 + $0xc8] sm:$0xff]
        %v432 = vld [vmem:[%s244 + $0xd0] sm:$0xff]
        %v433 = vld [vmem:[%s244 + $0xd8] sm:$0xff]
        %v434 = vld [vmem:[%s244 + $0xe0] sm:$0xff]
        %v435 = vld [vmem:[%s244 + $0xe8] sm:$0xff]
        %v436 = vld [vmem:[%s244 + $0xf0] sm:$0xff]
        %v437 = vld [vmem:[%s244 + $0xf8] sm:$0xff]
        %v438 = vld [vmem:[%s244 + $0x100] sm:$0xff]
        %v439 = vld [vmem:[%s244 + $0x108] sm:$0xff]
        %v440 = vld [vmem:[%s244 + $0x110] sm:$0xff]
        %v441 = vld [vmem:[%s244 + $0x118] sm:$0xff]
        %v442 = vld [vmem:[%s244 + $0x120] sm:$0xff]
        %v443 = vld [vmem:[%s244 + $0x128] sm:$0xff]
        %v444 = vld [vmem:[%s244 + $0x130] sm:$0xff]
        %v445 = vld [vmem:[%s244 + $0x138] sm:$0xff]
        %v446 = vld [vmem:[%s244 + $0x140] sm:$0xff]
        %v447 = vld [vmem:[%s244 + $0x148] sm:$0xff]
        %v448 = vld [vmem:[%s244 + $0x150] sm:$0xff]
        %v449 = vld [vmem:[%s244 + $0x158] sm:$0xff]
        %v450 = vld [vmem:[%s244 + $0x160] sm:$0xff]
        %v451 = vld [vmem:[%s244 + $0x168] sm:$0xff]
        %v452 = vld [vmem:[%s244 + $0x170] sm:$0xff]
        %v453 = vld [vmem:[%s244 + $0x178] sm:$0xff]
        %v454 = vld [vmem:[%s244 + $0x180] sm:$0xff]
        %v455 = vld [vmem:[%s244 + $0x188] sm:$0xff]
        %v456 = vld [vmem:[%s244 + $0x190] sm:$0xff]
        %v457 = vld [vmem:[%s244 + $0x198] sm:$0xff]
        %v458 = vld [vmem:[%s244 + $0x1a0] sm:$0xff]
        %v459 = vld [vmem:[%s244 + $0x1a8] sm:$0xff]
        %v460 = vld [vmem:[%s244 + $0x1b0] sm:$0xff]
        %v461 = vld [vmem:[%s244 + $0x1b8] sm:$0xff]
        %v462 = vld [vmem:[%s244 + $0x1c0] sm:$0xff]
        %v463 = vld [vmem:[%s244 + $0x1c8] sm:$0xff]
        %v464 = vld [vmem:[%s244 + $0x1d0] sm:$0xff]
        %v465 = vld [vmem:[%s244 + $0x1d8] sm:$0xff]
        %v466 = vld [vmem:[%s244 + $0x1e0] sm:$0xff]
        %v467 = vld [vmem:[%s244 + $0x1e8] sm:$0xff]
        %v468 = vld [vmem:[%s244 + $0x1f0] sm:$0xff]
        %v469 = vld [vmem:[%s244 + $0x1f8] sm:$0xff]
        %v470 = vpack.c.bf16 %v408, %v406
        %v471 = vpack.c.bf16 %v409, %v407
        %v472 = vpack.c.bf16 %v412, %v410
        %v473 = vpack.c.bf16 %v413, %v411
        %v474 = vpack.c.bf16 %v416, %v414
        %v475 = vpack.c.bf16 %v417, %v415
        %v476 = vpack.c.bf16 %v420, %v418
        %v477 = vpack.c.bf16 %v421, %v419
        %v478 = vpack.c.bf16 %v424, %v422
        %v479 = vpack.c.bf16 %v425, %v423
        %v480 = vpack.c.bf16 %v428, %v426
        %v481 = vpack.c.bf16 %v429, %v427
        %v482 = vpack.c.bf16 %v432, %v430
        %v483 = vpack.c.bf16 %v433, %v431
        %v484 = vpack.c.bf16 %v436, %v434
        %v485 = vpack.c.bf16 %v437, %v435
        %v486 = vpack.c.bf16 %v440, %v438
        %v487 = vpack.c.bf16 %v441, %v439
        %v488 = vpack.c.bf16 %v444, %v442
        %v489 = vpack.c.bf16 %v445, %v443
        %v490 = vpack.c.bf16 %v448, %v446
        %v491 = vpack.c.bf16 %v449, %v447
        %v492 = vpack.c.bf16 %v452, %v450
        %v493 = vpack.c.bf16 %v453, %v451
        %v494 = vpack.c.bf16 %v456, %v454
        %v495 = vpack.c.bf16 %v457, %v455
        %v496 = vpack.c.bf16 %v460, %v458
        %v497 = vpack.c.bf16 %v461, %v459
        %v498 = vpack.c.bf16 %v464, %v462
        %v499 = vpack.c.bf16 %v465, %v463
        %v500 = vpack.c.bf16 %v468, %v466
        %v501 = vpack.c.bf16 %v469, %v467
        %502 = vmatpush.bf16.msra.mxu0 %v484
        %503 = vmatpush.bf16.msra.mxu0 %v482
        %504 = vmatpush.bf16.msra.mxu0 %v480
        %505 = vmatpush.bf16.msra.mxu0 %v478
        %506 = vmatpush.bf16.msra.mxu0 %v476
        %507 = vmatpush.bf16.msra.mxu0 %v474
        %508 = vmatpush.bf16.msra.mxu0 %v472
        %509 = vmatpush.bf16.msra.mxu0 %v470
        %510 = vmatmul.bf16.gmra.mxu0 %v390
        %v511 = vpop.f32.mrf.mxu0
        %v512 = vadd.f32 0.0, %v511
        %v513 = vpop.f32.mrf.mxu0
        %v514 = vadd.f32 0.0, %v513
        %515 = vmatmul.bf16.gmra.mxu0 %v392
        %v516 = vpop.f32.mrf.mxu0
        %v517 = vadd.f32 0.0, %v516
        %v518 = vpop.f32.mrf.mxu0
        %v519 = vadd.f32 0.0, %v518
        %520 = vmatmul.bf16.gmra.mxu0 %v394
        %v521 = vpop.f32.mrf.mxu0
        %v522 = vadd.f32 0.0, %v521
        %v523 = vpop.f32.mrf.mxu0
        %v524 = vadd.f32 0.0, %v523
        %525 = vmatmul.bf16.gmra.mxu0 %v396
        %v526 = vpop.f32.mrf.mxu0
        %v527 = vadd.f32 0.0, %v526
        %v528 = vpop.f32.mrf.mxu0
        %v529 = vadd.f32 0.0, %v528
        %530 = vmatmul.bf16.gmra.mxu0 %v398
        %v531 = vpop.f32.mrf.mxu0
        %v532 = vadd.f32 0.0, %v531
        %v533 = vpop.f32.mrf.mxu0
        %v534 = vadd.f32 0.0, %v533
        %535 = vmatmul.bf16.gmra.mxu0 %v400
        %v536 = vpop.f32.mrf.mxu0
        %v537 = vadd.f32 0.0, %v536
        %v538 = vpop.f32.mrf.mxu0
        %v539 = vadd.f32 0.0, %v538
        %540 = vmatmul.bf16.gmra.mxu0 %v402
        %v541 = vpop.f32.mrf.mxu0
        %v542 = vadd.f32 0.0, %v541
        %v543 = vpop.f32.mrf.mxu0
        %v544 = vadd.f32 0.0, %v543
        %545 = vmatmul.bf16.gmra.mxu0 %v404
        %v546 = vpop.f32.mrf.mxu0
        %v547 = vadd.f32 0.0, %v546
        %v548 = vpop.f32.mrf.mxu0
        %v549 = vadd.f32 0.0, %v548
        %550 = vdwg.mxu0
        %551 = vmatpush.bf16.msra.mxu0 %v500
        %552 = vmatpush.bf16.msra.mxu0 %v498
        %553 = vmatpush.bf16.msra.mxu0 %v496
        %554 = vmatpush.bf16.msra.mxu0 %v494
        %555 = vmatpush.bf16.msra.mxu0 %v492
        %556 = vmatpush.bf16.msra.mxu0 %v490
        %557 = vmatpush.bf16.msra.mxu0 %v488
        %558 = vmatpush.bf16.msra.mxu0 %v486
        %559 = vmatmul.bf16.gmra.mxu0 %v391
        %v560 = vpop.f32.mrf.mxu0
        %v561 = vadd.f32 %v512, %v560
        %v562 = vpop.f32.mrf.mxu0
        %v563 = vadd.f32 %v514, %v562
        %564 = vmatmul.bf16.gmra.mxu0 %v393
        %v565 = vpop.f32.mrf.mxu0
        %v566 = vadd.f32 %v517, %v565
        %v567 = vpop.f32.mrf.mxu0
        %v568 = vadd.f32 %v519, %v567
        %569 = vmatmul.bf16.gmra.mxu0 %v395
        %v570 = vpop.f32.mrf.mxu0
        %v571 = vadd.f32 %v522, %v570
        %v572 = vpop.f32.mrf.mxu0
        %v573 = vadd.f32 %v524, %v572
        %574 = vmatmul.bf16.gmra.mxu0 %v397
        %v575 = vpop.f32.mrf.mxu0
        %v576 = vadd.f32 %v527, %v575
        %v577 = vpop.f32.mrf.mxu0
        %v578 = vadd.f32 %v529, %v577
        %579 = vmatmul.bf16.gmra.mxu0 %v399
        %v580 = vpop.f32.mrf.mxu0
        %v581 = vadd.f32 %v532, %v580
        %v582 = vpop.f32.mrf.mxu0
        %v583 = vadd.f32 %v534, %v582
        %584 = vmatmul.bf16.gmra.mxu0 %v401
        %v585 = vpop.f32.mrf.mxu0
        %v586 = vadd.f32 %v537, %v585
        %v587 = vpop.f32.mrf.mxu0
        %v588 = vadd.f32 %v539, %v587
        %589 = vmatmul.bf16.gmra.mxu0 %v403
        %v590 = vpop.f32.mrf.mxu0
        %v591 = vadd.f32 %v542, %v590
        %v592 = vpop.f32.mrf.mxu0
        %v593 = vadd.f32 %v544, %v592
        %594 = vmatmul.bf16.gmra.mxu0 %v405
        %v595 = vpop.f32.mrf.mxu0
        %v596 = vadd.f32 %v547, %v595
        %v597 = vpop.f32.mrf.mxu0
        %v598 = vadd.f32 %v549, %v597
        %599 = vdwg.mxu0
        %600 = vmatpush.bf16.msra.mxu0 %v485
        %601 = vmatpush.bf16.msra.mxu0 %v483
        %602 = vmatpush.bf16.msra.mxu0 %v481
        %603 = vmatpush.bf16.msra.mxu0 %v479
        %604 = vmatpush.bf16.msra.mxu0 %v477
        %605 = vmatpush.bf16.msra.mxu0 %v475
        %606 = vmatpush.bf16.msra.mxu0 %v473
        %607 = vmatpush.bf16.msra.mxu0 %v471
        %608 = vmatmul.bf16.gmra.mxu0 %v390
        %v609 = vpop.f32.mrf.mxu0
        %v610 = vadd.f32 0.0, %v609
        %v611 = vpop.f32.mrf.mxu0
        %v612 = vadd.f32 0.0, %v611
        %613 = vmatmul.bf16.gmra.mxu0 %v392
        %v614 = vpop.f32.mrf.mxu0
        %v615 = vadd.f32 0.0, %v614
        %v616 = vpop.f32.mrf.mxu0
        %v617 = vadd.f32 0.0, %v616
        %618 = vmatmul.bf16.gmra.mxu0 %v394
        %v619 = vpop.f32.mrf.mxu0
        %v620 = vadd.f32 0.0, %v619
        %v621 = vpop.f32.mrf.mxu0
        %v622 = vadd.f32 0.0, %v621
        %623 = vmatmul.bf16.gmra.mxu0 %v396
        %v624 = vpop.f32.mrf.mxu0
        %v625 = vadd.f32 0.0, %v624
        %v626 = vpop.f32.mrf.mxu0
        %v627 = vadd.f32 0.0, %v626
        %628 = vmatmul.bf16.gmra.mxu0 %v398
        %v629 = vpop.f32.mrf.mxu0
        %v630 = vadd.f32 0.0, %v629
        %v631 = vpop.f32.mrf.mxu0
        %v632 = vadd.f32 0.0, %v631
        %633 = vmatmul.bf16.gmra.mxu0 %v400
        %v634 = vpop.f32.mrf.mxu0
        %v635 = vadd.f32 0.0, %v634
        %v636 = vpop.f32.mrf.mxu0
        %v637 = vadd.f32 0.0, %v636
        %638 = vmatmul.bf16.gmra.mxu0 %v402
        %v639 = vpop.f32.mrf.mxu0
        %v640 = vadd.f32 0.0, %v639
        %v641 = vpop.f32.mrf.mxu0
        %v642 = vadd.f32 0.0, %v641
        %643 = vmatmul.bf16.gmra.mxu0 %v404
        %v644 = vpop.f32.mrf.mxu0
        %v645 = vadd.f32 0.0, %v644
        %v646 = vpop.f32.mrf.mxu0
        %v647 = vadd.f32 0.0, %v646
        %648 = vdwg.mxu0
        %649 = vmatpush.bf16.msra.mxu0 %v501
        %650 = vmatpush.bf16.msra.mxu0 %v499
        %651 = vmatpush.bf16.msra.mxu0 %v497
        %652 = vmatpush.bf16.msra.mxu0 %v495
        %653 = vmatpush.bf16.msra.mxu0 %v493
        %654 = vmatpush.bf16.msra.mxu0 %v491
        %655 = vmatpush.bf16.msra.mxu0 %v489
        %656 = vmatpush.bf16.msra.mxu0 %v487
        %657 = vmatmul.bf16.gmra.mxu0 %v391
        %v658 = vpop.f32.mrf.mxu0
        %v659 = vadd.f32 %v610, %v658
        %v660 = vpop.f32.mrf.mxu0
        %v661 = vadd.f32 %v612, %v660
        %662 = vmatmul.bf16.gmra.mxu0 %v393
        %v663 = vpop.f32.mrf.mxu0
        %v664 = vadd.f32 %v615, %v663
        %v665 = vpop.f32.mrf.mxu0
        %v666 = vadd.f32 %v617, %v665
        %667 = vmatmul.bf16.gmra.mxu0 %v395
        %v668 = vpop.f32.mrf.mxu0
        %v669 = vadd.f32 %v620, %v668
        %v670 = vpop.f32.mrf.mxu0
        %v671 = vadd.f32 %v622, %v670
        %672 = vmatmul.bf16.gmra.mxu0 %v397
        %v673 = vpop.f32.mrf.mxu0
        %v674 = vadd.f32 %v625, %v673
        %v675 = vpop.f32.mrf.mxu0
        %v676 = vadd.f32 %v627, %v675
        %677 = vmatmul.bf16.gmra.mxu0 %v399
        %v678 = vpop.f32.mrf.mxu0
        %v679 = vadd.f32 %v630, %v678
        %v680 = vpop.f32.mrf.mxu0
        %v681 = vadd.f32 %v632, %v680
        %682 = vmatmul.bf16.gmra.mxu0 %v401
        %v683 = vpop.f32.mrf.mxu0
        %v684 = vadd.f32 %v635, %v683
        %v685 = vpop.f32.mrf.mxu0
        %v686 = vadd.f32 %v637, %v685
        %687 = vmatmul.bf16.gmra.mxu0 %v403
        %v688 = vpop.f32.mrf.mxu0
        %v689 = vadd.f32 %v640, %v688
        %v690 = vpop.f32.mrf.mxu0
        %v691 = vadd.f32 %v642, %v690
        %692 = vmatmul.bf16.gmra.mxu0 %v405
        %v693 = vpop.f32.mrf.mxu0
        %v694 = vadd.f32 %v645, %v693
        %v695 = vpop.f32.mrf.mxu0
        %v696 = vadd.f32 %v647, %v695
        %697 = vdwg.mxu0
        %v698 = vadd.f32 %v326, %v561
        %v699 = vadd.f32 %v327, %v659
        %v700 = vadd.f32 %v328, %v563
        %v701 = vadd.f32 %v329, %v661
        %v702 = vadd.f32 %v330, %v566
        %v703 = vadd.f32 %v331, %v664
        %v704 = vadd.f32 %v332, %v568
        %v705 = vadd.f32 %v333, %v666
        %v706 = vadd.f32 %v334, %v571
        %v707 = vadd.f32 %v335, %v669
        %v708 = vadd.f32 %v336, %v573
        %v709 = vadd.f32 %v337, %v671
        %v710 = vadd.f32 %v338, %v576
        %v711 = vadd.f32 %v339, %v674
        %v712 = vadd.f32 %v340, %v578
        %v713 = vadd.f32 %v341, %v676
        %v714 = vadd.f32 %v342, %v581
        %v715 = vadd.f32 %v343, %v679
        %v716 = vadd.f32 %v344, %v583
        %v717 = vadd.f32 %v345, %v681
        %v718 = vadd.f32 %v346, %v586
        %v719 = vadd.f32 %v347, %v684
        %v720 = vadd.f32 %v348, %v588
        %v721 = vadd.f32 %v349, %v686
        %v722 = vadd.f32 %v350, %v591
        %v723 = vadd.f32 %v351, %v689
        %v724 = vadd.f32 %v352, %v593
        %v725 = vadd.f32 %v353, %v691
        %v726 = vadd.f32 %v354, %v596
        %v727 = vadd.f32 %v355, %v694
        %v728 = vadd.f32 %v356, %v598
        %v729 = vadd.f32 %v357, %v696
        %730 = vst [vmem:[#allocation2] sm:$0xff] %v698
        %731 = vst [vmem:[#allocation2 + $0x8] sm:$0xff] %v699
        %732 = vst [vmem:[#allocation2 + $0x10] sm:$0xff] %v700
        %733 = vst [vmem:[#allocation2 + $0x18] sm:$0xff] %v701
        %734 = vst [vmem:[#allocation2 + $0x20] sm:$0xff] %v702
        %735 = vst [vmem:[#allocation2 + $0x28] sm:$0xff] %v703
        %736 = vst [vmem:[#allocation2 + $0x30] sm:$0xff] %v704
        %737 = vst [vmem:[#allocation2 + $0x38] sm:$0xff] %v705
        %738 = vst [vmem:[#allocation2 + $0x40] sm:$0xff] %v706
        %739 = vst [vmem:[#allocation2 + $0x48] sm:$0xff] %v707
        %740 = vst [vmem:[#allocation2 + $0x50] sm:$0xff] %v708
        %741 = vst [vmem:[#allocation2 + $0x58] sm:$0xff] %v709
        %742 = vst [vmem:[#allocation2 + $0x60] sm:$0xff] %v710
        %743 = vst [vmem:[#allocation2 + $0x68] sm:$0xff] %v711
        %744 = vst [vmem:[#allocation2 + $0x70] sm:$0xff] %v712
        %745 = vst [vmem:[#allocation2 + $0x78] sm:$0xff] %v713
        %746 = vst [vmem:[#allocation2 + $0x80] sm:$0xff] %v714
        %747 = vst [vmem:[#allocation2 + $0x88] sm:$0xff] %v715
        %748 = vst [vmem:[#allocation2 + $0x90] sm:$0xff] %v716
        %749 = vst [vmem:[#allocation2 + $0x98] sm:$0xff] %v717
        %750 = vst [vmem:[#allocation2 + $0xa0] sm:$0xff] %v718
        %751 = vst [vmem:[#allocation2 + $0xa8] sm:$0xff] %v719
        %752 = vst [vmem:[#allocation2 + $0xb0] sm:$0xff] %v720
        %753 = vst [vmem:[#allocation2 + $0xb8] sm:$0xff] %v721
        %754 = vst [vmem:[#allocation2 + $0xc0] sm:$0xff] %v722
        %755 = vst [vmem:[#allocation2 + $0xc8] sm:$0xff] %v723
        %756 = vst [vmem:[#allocation2 + $0xd0] sm:$0xff] %v724
        %757 = vst [vmem:[#allocation2 + $0xd8] sm:$0xff] %v725
        %758 = vst [vmem:[#allocation2 + $0xe0] sm:$0xff] %v726
        %759 = vst [vmem:[#allocation2 + $0xe8] sm:$0xff] %v727
        %760 = vst [vmem:[#allocation2 + $0xf0] sm:$0xff] %v728
        %761 = vst [vmem:[#allocation2 + $0xf8] sm:$0xff] %v729
        // Predicated region
        $region49: #{tpu_custom_call.1} parent=31 // pred_check
          %p762 = pneg %p290
        $region50: #{tpu_custom_call.1} parent=31 // pred_check_branch
          %764 = sbr.rel (%p762) target = $region52
        $region51: #{tpu_custom_call.1} parent=31 // pred_region
          %v765 = vld [vmem:[#allocation2] sm:$0xff]
          %v766 = vld [vmem:[#allocation2 + $0x8] sm:$0xff]
          %v767 = vld [vmem:[#allocation2 + $0x10] sm:$0xff]
          %v768 = vld [vmem:[#allocation2 + $0x18] sm:$0xff]
          %v769 = vld [vmem:[#allocation2 + $0x20] sm:$0xff]
          %v770 = vld [vmem:[#allocation2 + $0x28] sm:$0xff]
          %v771 = vld [vmem:[#allocation2 + $0x30] sm:$0xff]
          %v772 = vld [vmem:[#allocation2 + $0x38] sm:$0xff]
          %v773 = vld [vmem:[#allocation2 + $0x40] sm:$0xff]
          %v774 = vld [vmem:[#allocation2 + $0x48] sm:$0xff]
          %v775 = vld [vmem:[#allocation2 + $0x50] sm:$0xff]
          %v776 = vld [vmem:[#allocation2 + $0x58] sm:$0xff]
          %v777 = vld [vmem:[#allocation2 + $0x60] sm:$0xff]
          %v778 = vld [vmem:[#allocation2 + $0x68] sm:$0xff]
          %v779 = vld [vmem:[#allocation2 + $0x70] sm:$0xff]
          %v780 = vld [vmem:[#allocation2 + $0x78] sm:$0xff]
          %v781 = vld [vmem:[#allocation2 + $0x80] sm:$0xff]
          %v782 = vld [vmem:[#allocation2 + $0x88] sm:$0xff]
          %v783 = vld [vmem:[#allocation2 + $0x90] sm:$0xff]
          %v784 = vld [vmem:[#allocation2 + $0x98] sm:$0xff]
          %v785 = vld [vmem:[#allocation2 + $0xa0] sm:$0xff]
          %v786 = vld [vmem:[#allocation2 + $0xa8] sm:$0xff]
          %v787 = vld [vmem:[#allocation2 + $0xb0] sm:$0xff]
          %v788 = vld [vmem:[#allocation2 + $0xb8] sm:$0xff]
          %v789 = vld [vmem:[#allocation2 + $0xc0] sm:$0xff]
          %v790 = vld [vmem:[#allocation2 + $0xc8] sm:$0xff]
          %v791 = vld [vmem:[#allocation2 + $0xd0] sm:$0xff]
          %v792 = vld [vmem:[#allocation2 + $0xd8] sm:$0xff]
          %v793 = vld [vmem:[#allocation2 + $0xe0] sm:$0xff]
          %v794 = vld [vmem:[#allocation2 + $0xe8] sm:$0xff]
          %v795 = vld [vmem:[#allocation2 + $0xf0] sm:$0xff]
          %v796 = vld [vmem:[#allocation2 + $0xf8] sm:$0xff]
          %v797 = vld [vmem:[%s254] sm:$0x3]
          %v799 = vperm.slane %v797, 0
          %v800 = vperm.slane %v797, 1
          %v803 = vadd.f32 %v765, %v799
          %v804 = vadd.f32 %v766, %v800
          %v805 = vadd.f32 %v767, %v799
          %v806 = vadd.f32 %v768, %v800
          %v807 = vadd.f32 %v769, %v799
          %v808 = vadd.f32 %v770, %v800
          %v809 = vadd.f32 %v771, %v799
          %v810 = vadd.f32 %v772, %v800
          %v811 = vadd.f32 %v773, %v799
          %v812 = vadd.f32 %v774, %v800
          %v813 = vadd.f32 %v775, %v799
          %v814 = vadd.f32 %v776, %v800
          %v815 = vadd.f32 %v777, %v799
          %v816 = vadd.f32 %v778, %v800
          %v817 = vadd.f32 %v779, %v799
          %v818 = vadd.f32 %v780, %v800
          %v819 = vadd.f32 %v781, %v799
          %v820 = vadd.f32 %v782, %v800
          %v821 = vadd.f32 %v783, %v799
          %v822 = vadd.f32 %v784, %v800
          %v823 = vadd.f32 %v785, %v799
          %v824 = vadd.f32 %v786, %v800
          %v825 = vadd.f32 %v787, %v799
          %v826 = vadd.f32 %v788, %v800
          %v827 = vadd.f32 %v789, %v799
          %v828 = vadd.f32 %v790, %v800
          %v829 = vadd.f32 %v791, %v799
          %v830 = vadd.f32 %v792, %v800
          %v831 = vadd.f32 %v793, %v799
          %v832 = vadd.f32 %v794, %v800
          %v833 = vadd.f32 %v795, %v799
          %v834 = vadd.f32 %v796, %v800
          %835 = vst [vmem:[%s282] sm:$0xff] %v803
          %836 = vst [vmem:[%s282 + $0x8] sm:$0xff] %v804
          %837 = vst [vmem:[%s282 + $0x10] sm:$0xff] %v805
          %838 = vst [vmem:[%s282 + $0x18] sm:$0xff] %v806
          %839 = vst [vmem:[%s282 + $0x20] sm:$0xff] %v807
          %840 = vst [vmem:[%s282 + $0x28] sm:$0xff] %v808
          %841 = vst [vmem:[%s282 + $0x30] sm:$0xff] %v809
          %842 = vst [vmem:[%s282 + $0x38] sm:$0xff] %v810
          %843 = vst [vmem:[%s282 + $0x40] sm:$0xff] %v811
          %844 = vst [vmem:[%s282 + $0x48] sm:$0xff] %v812
          %845 = vst [vmem:[%s282 + $0x50] sm:$0xff] %v813
          %846 = vst [vmem:[%s282 + $0x58] sm:$0xff] %v814
          %847 = vst [vmem:[%s282 + $0x60] sm:$0xff] %v815
          %848 = vst [vmem:[%s282 + $0x68] sm:$0xff] %v816
          %849 = vst [vmem:[%s282 + $0x70] sm:$0xff] %v817
          %850 = vst [vmem:[%s282 + $0x78] sm:$0xff] %v818
          %851 = vst [vmem:[%s282 + $0x80] sm:$0xff] %v819
          %852 = vst [vmem:[%s282 + $0x88] sm:$0xff] %v820
          %853 = vst [vmem:[%s282 + $0x90] sm:$0xff] %v821
          %854 = vst [vmem:[%s282 + $0x98] sm:$0xff] %v822
          %855 = vst [vmem:[%s282 + $0xa0] sm:$0xff] %v823
          %856 = vst [vmem:[%s282 + $0xa8] sm:$0xff] %v824
          %857 = vst [vmem:[%s282 + $0xb0] sm:$0xff] %v825
          %858 = vst [vmem:[%s282 + $0xb8] sm:$0xff] %v826
          %859 = vst [vmem:[%s282 + $0xc0] sm:$0xff] %v827
          %860 = vst [vmem:[%s282 + $0xc8] sm:$0xff] %v828
          %861 = vst [vmem:[%s282 + $0xd0] sm:$0xff] %v829
          %862 = vst [vmem:[%s282 + $0xd8] sm:$0xff] %v830
          %863 = vst [vmem:[%s282 + $0xe0] sm:$0xff] %v831
          %864 = vst [vmem:[%s282 + $0xe8] sm:$0xff] %v832
          %865 = vst [vmem:[%s282 + $0xf0] sm:$0xff] %v833
          %866 = vst [vmem:[%s282 + $0xf8] sm:$0xff] %v834
        $region52: #{tpu_custom_call.1} parent=31 // pred_fallthru
          _
        %s867 = sand.u32 %s132, 1
        %s868 = scalar_lea.sflag [#allocation5], %s867
        %s869 = sand.u32 %s132, 1
        %s870 = smul.addr %s869, 256
        %s871 = scalar_lea.vmem [#allocation9], %s870
        // Predicated region
        $region53: #{tpu_custom_call.1} parent=31 // pred_check
          %p872 = pneg %p142
        $region54: #{tpu_custom_call.1} parent=31 // pred_check_branch
          %874 = sbr.rel (%p872) target = $region56
        $region55: #{tpu_custom_call.1} parent=31 // pred_region
          %s875 = smul.u32 16, %s26
          %s876 = smul.u32 2, %s27
          %878 = vsyncadd %s868, 0
          %s879 = smul.addr %s875, 6
          %s880 = sadd.s32 %s876, %s879
          %s881 = smul.addr %s880, 8
          %s882 = scalar_lea.hbm %s3, %s881
          %s883 = sshll.u32 %s871, 4
          %s884 = int_to_ptr.vmem [resolvable:$true] %s883
          %s885 = sshll.u32 %s882, 4
          %s886 = int_to_ptr.hbm [resolvable:$true] %s885
          %891 = dma.vmem_to_hbm [thread:$0]  %s884, 4096, %s886, %s868, 256, 768, 16
        $region56: #{tpu_custom_call.1} parent=31 // pred_fallthru
          _
      $region32: #{tpu_custom_call.1} parent=5 // pred_fallthru
        _
      %p892 = scmp.le.s32.totalorder 2, %s16
      // Predicated region
      $region57: #{tpu_custom_call.1} parent=5 // pred_check
        %p893 = pneg %p892
      $region58: #{tpu_custom_call.1} parent=5 // pred_check_branch
        %895 = sbr.rel (%p893) target = $region60
      $region59: #{tpu_custom_call.1} parent=5 // pred_region
        %s896 = ssub.s32 %s16, 2
        // Predicated region
        $region61: #{tpu_custom_call.1} parent=59 // pred_check
          %p897 = pneg %p148
        $region62: #{tpu_custom_call.1} parent=59 // pred_check_branch
          %899 = sbr.rel (%p897) target = $region64
        $region63: #{tpu_custom_call.1} parent=59 // pred_region
          %s900 = sand.u32 %s133, 1
          %s901 = scalar_lea.sflag [#allocation5], %s900
          %s902 = sand.u32 %s133, 1
          %s903 = smul.addr %s902, 256
          %s904 = scalar_lea.vmem [#allocation9], %s903
          %906 = dma.done %s901, 4096
        $region64: #{tpu_custom_call.1} parent=59 // pred_fallthru
          _
      $region60: #{tpu_custom_call.1} parent=5 // pred_fallthru
        _
    $region6: #{tpu_custom_call.1} parent=1 // loop_footer
      %s20 = sadd.s32 1, %s16
    $region7: #{tpu_custom_call.1} parent=1 // loop_footer_branch
      %15 = sbr.rel target = $region3
    $region8: #{tpu_custom_call.1} parent=1 // loop_exit
      _
    %907 = vsyncpa [#allocation4], 1
    %s908 = scalar_lea.sflag [#allocation4], 1
    %909 = vsyncpa %s908, 1
    %910 = vsyncpa [#allocation7], 1
    %s911 = scalar_lea.sflag [#allocation7], 1
    %912 = vsyncpa %s911, 1
    %913 = vsyncpa [#allocation5], 1
    %s914 = scalar_lea.sflag [#allocation5], 1
    %915 = vsyncpa %s914, 1

</llo_original>
